<compile_context>
chip_gen: v6e
topology: v6e:2x2x1
jax: 0.10.0
libtpu: 0.0.40
codegen_flags: <defaults>
</compile_context>

<pallas_src>
import functools

import jax
import jax.numpy as jnp
from jax.experimental import pallas as pl
from jax.experimental.pallas import tpu as pltpu

_VMEM_LIMIT_BYTES = 48 * 1024 * 1024   # < 64 MiB (v7x physical), > scoped defaults
_TILE_BUDGET_BYTES = 24 * 1024 * 1024  # 2x in + 2x out tiles + f32 upcast temp


def _scale_norm_kernel(scala_ref, x_ref, o_ref, *, eps: float, inv_d: float):
    # x_ref: (block_rows, d) tile in VMEM; scala_ref: (1,) scalar in SMEM.
    x = x_ref[...].astype(jnp.float32)
    # sum(x^2) then fold 1/d and scala into a single per-row factor so the
    # per-element work is one broadcast multiply (VPU) + rsqrt on the EUP.
    ms = jnp.sum(x * x, axis=-1, keepdims=True) * inv_d          # (block_rows, 1)
    factor = jax.lax.rsqrt(ms + eps) * scala_ref[0]              # per-row only
    o_ref[...] = (x * factor).astype(o_ref.dtype)


def _pick_block_rows(rows: int, d: int, itemsize: int) -> int:
    """Largest row tile that fits the VMEM budget, aligned to sublane packing."""
    # bf16 packs 2 rows per sublane -> multiples of 16; f32 -> multiples of 8.
    mult = 16 if itemsize < 4 else 8
    # Per-row footprint: double-buffered input + output tiles + f32 temp.
    bytes_per_row = d * (4 * itemsize + 4)
    br = _TILE_BUDGET_BYTES // max(bytes_per_row, 1)
    br = min(br, 1024)
    # Keep a handful of grid steps when the problem is big enough, so v7x's
    # two TensorCores both get work from the "parallel" row axis.
    if rows >= 8 * mult:
        br = min(br, rows // 4)
    # Don't make the tile taller than the (sublane-rounded) problem.
    br = min(br, ((rows + mult - 1) // mult) * mult)
    br = max((br // mult) * mult, mult)
    return int(br)


def scale_norm(x: jax.Array, scala: jax.Array, eps: float = 1e-5,
               block_rows: int | None = None) -> jax.Array:
    """Applies ScaleNorm over the last axis of x."""
    orig_shape = x.shape
    d = orig_shape[-1]
    x2d = x.reshape(-1, d)
    rows = x2d.shape[0]
    itemsize = jnp.dtype(x.dtype).itemsize
    if block_rows is None:
        block_rows = _pick_block_rows(rows, d, itemsize)

    # TODO(synk): for d < 128 a lane-dense repack (several rows per 128-lane
    # slab) would avoid masked vst; not implemented here.

    scala_arr = jnp.asarray(scala, dtype=jnp.float32).reshape(1)

    grid = (pl.cdiv(rows, block_rows),)
    n = rows * d
    cost = pl.CostEstimate(
        flops=3 * n,
        transcendentals=rows,
        bytes_accessed=2 * n * itemsize + 4,
    )

    out = pl.pallas_call(
        functools.partial(_scale_norm_kernel, eps=float(eps), inv_d=1.0 / d),
        out_shape=jax.ShapeDtypeStruct((rows, d), x.dtype),
        grid_spec=pl.GridSpec(
            grid=grid,
            in_specs=[
                # scalar parameter, kept whole in SMEM for every grid step
                pl.BlockSpec(memory_space=pltpu.MemorySpace.SMEM),
                # one tile of rows, full feature dim (last tile auto-padded/masked)
                pl.BlockSpec((block_rows, d), lambda i: (i, 0)),
            ],
            out_specs=pl.BlockSpec((block_rows, d), lambda i: (i, 0)),
        ),
        compiler_params=pltpu.CompilerParams(
            dimension_semantics=("parallel",),
            vmem_limit_bytes=_VMEM_LIMIT_BYTES,
        ),
        cost_estimate=cost,
    )(scala_arr, x2d)

    return out.reshape(orig_shape)


def scale_norm_ref(x, scala, eps=1e-5):
    xf = x.astype(jnp.float32)
    ms = jnp.mean(xf * xf, axis=-1, keepdims=True)
    return (xf * jax.lax.rsqrt(ms + eps) * scala).astype(x.dtype)


if __name__ == "__main__":
    key = jax.random.PRNGKey(0)

    # Deterministic parameter init, matching nn.Parameter(torch.ones(1)).
    scala = jnp.ones((1,), dtype=jnp.float32)

    # Lane-dense hidden dim (multiple of 128).
    batch, seq, hidden = 2, 8, 128
    x = jax.random.normal(key, (batch, seq, hidden), dtype=jnp.float32)
    y = jax.block_until_ready(scale_norm(x, scala, eps=1e-5))
    y_ref = scale_norm_ref(x, scala, eps=1e-5)
    assert y.shape == x.shape and y.dtype == x.dtype
    assert jnp.allclose(y, y_ref, atol=1e-5, rtol=1e-5)

    # Ragged row count exercises the cdiv grid + padded/masked last tile.
    x2 = jax.random.normal(jax.random.PRNGKey(1), (3, 5, 128), dtype=jnp.float32)
    y2 = jax.block_until_ready(scale_norm(x2, scala, eps=1e-5))
    assert jnp.allclose(y2, scale_norm_ref(x2, scala, eps=1e-5),
                        atol=1e-5, rtol=1e-5)

    print("KERNEL_OK")
</pallas_src>

<mosaic_0001>
module attributes {stable_mosaic.version = 11 : i64} {
  func.func @_scale_norm_kernel(%arg0: i32, %arg1: memref<1xf32, #tpu.memory_space<smem>>, %arg2: memref<16x128xf32, #tpu.memory_space<vmem>>, %arg3: memref<16x128xf32, #tpu.memory_space<vmem>>) attributes {dimension_semantics = [#tpu.dimension_semantics<parallel>], iteration_bounds = array<i64: 1>, scalar_prefetch = 0 : i64, scratch_operands = 0 : i64, tpu.core_type = #tpu.core_type<tc>, window_params = [{transform_indices = @transform_0, window_bounds = array<i64: 1>}, {transform_indices = @transform_1, window_bounds = array<i64: 16, 128>}, {transform_indices = @transform_2, window_bounds = array<i64: 16, 128>}]} {
    %c0 = arith.constant 0 : index
    %c0_0 = arith.constant 0 : index
    %0 = vector.load %arg2[%c0, %c0_0] : memref<16x128xf32, #tpu.memory_space<vmem>>, vector<16x128xf32>
    %1 = arith.mulf %0, %0 : vector<16x128xf32>
    %cst = arith.constant dense<0.000000e+00> : vector<16xf32>
    %2 = vector.multi_reduction <add>, %1, %cst [1] : vector<16x128xf32> to vector<16xf32>
    %3 = vector.shape_cast %2 : vector<16xf32> to vector<16x1xf32>
    %cst_1 = arith.constant 7.812500e-03 : f32
    %4 = vector.broadcast %cst_1 : f32 to vector<16x1xf32>
    %5 = arith.mulf %3, %4 : vector<16x1xf32>
    %cst_2 = arith.constant 9.99999974E-6 : f32
    %6 = vector.broadcast %cst_2 : f32 to vector<16x1xf32>
    %7 = arith.addf %5, %6 : vector<16x1xf32>
    %8 = math.rsqrt %7 : vector<16x1xf32>
    %c0_3 = arith.constant 0 : index
    %9 = memref.load %arg1[%c0_3] : memref<1xf32, #tpu.memory_space<smem>>
    %10 = vector.broadcast %9 : f32 to vector<16x1xf32>
    %11 = arith.mulf %8, %10 : vector<16x1xf32>
    %12 = vector.broadcast %11 : vector<16x1xf32> to vector<16x128xf32>
    %13 = arith.mulf %0, %12 : vector<16x128xf32>
    %c0_4 = arith.constant 0 : index
    %c0_5 = arith.constant 0 : index
    %14 = vector.load %arg3[%c0_4, %c0_5] : memref<16x128xf32, #tpu.memory_space<vmem>>, vector<16x128xf32>
    tpu.vector_store %arg3[%c0_4, %c0_5], %13 {strides = array<i32>} : memref<16x128xf32, #tpu.memory_space<vmem>>, vector<16x128xf32>,
    return
  }
  func.func @transform_0(%arg0: i32) -> i32 {
    %c0_i32 = arith.constant 0 : i32
    %c0_i32_0 = arith.constant 0 : i32
    return %c0_i32 : i32
  }
  func.func @transform_1(%arg0: i32) -> (i32, i32) {
    %c0_i32 = arith.constant 0 : i32
    %c0_i32_0 = arith.constant 0 : i32
    return %arg0, %c0_i32 : i32, i32
  }
  func.func @transform_2(%arg0: i32) -> (i32, i32) {
    %c0_i32 = arith.constant 0 : i32
    %c0_i32_0 = arith.constant 0 : i32
    return %arg0, %c0_i32 : i32, i32
  }
}

</mosaic_0001>

<llo_original>
// kernel: tpu_custom_call.1
$region0: #{tpu_custom_call.1}
  #allocation0 [shape = 'u32[]', space=smem, size = 0x4, offset = 0x4, fixed_abs, tag = 'smem constant byte address 0x4 - core index']
  #allocation1 [shape = 'u32[144,128]{1,0:T(1,128)}', space=vmem, size = 0x12000, scoped, tag = 'internal scratch']
  #allocation2 [shape = 'f32[1]{0:T(128)S(6)}', space=smem, size = 0x200, scoped, tag = 'scoped memory for tpu_custom_call.1']
  %s0 = inlined_call_operand.<no memory space> [shape: f32[1], index: 0, kind: input, shape index: {}]
  %s1 = inlined_call_operand.hbm [shape: f32[16,128], index: 1, kind: input, shape index: {}]
  %s2 = inlined_call_operand.hbm [shape: f32[16,128], index: 2, kind: output, shape index: {}]
  %s3 = sld [smem:[#allocation0]]
  $region22: #{tpu_custom_call.1} parent=0
    _
  %s5 = ssub.s32 1, %s3
  %s6 = scalar_select 0, %s5, %s3
  %7 = sst [smem:[#allocation2]] %s0
  $region1: #{tpu_custom_call.1} parent=0
    #allocation3 [shape = 'u8[8192]{0}', space=vmem, size = 0x2000, scoped, tag = 'input window, operand 1, single buffered']
    #allocation4 [shape = 's32[1]{0}', space=sflag, size = 0x4, scoped, tag = 'scoped memory for tpu_custom_call.1']
    #allocation5 [shape = 's32[1]{0}', space=sflag, size = 0x4, scoped, tag = 'scoped memory for tpu_custom_call.1']
    #allocation6 [shape = 'u8[8192]{0}', space=vmem, size = 0x2000, scoped, tag = 'output window, operand 0, single buffered']
    %8 = vsyncpa [#allocation4], 0
    %9 = vsyncpa [#allocation5], 0
    // Predicated region
    $region2: #{tpu_custom_call.1} parent=1 // pred_check
      _
    $region3: #{tpu_custom_call.1} parent=1 // pred_check_branch
      %11 = sbr.rel (0) target = $region5
    $region4: #{tpu_custom_call.1} parent=1 // pred_region
      _
    $region5: #{tpu_custom_call.1} parent=1 // pred_fallthru
      _
    // Predicated region
    $region6: #{tpu_custom_call.1} parent=1 // pred_check
      _
    $region7: #{tpu_custom_call.1} parent=1 // pred_check_branch
      %13 = sbr.rel (0) target = $region9
    $region8: #{tpu_custom_call.1} parent=1 // pred_region
      %s15 = ssub.s32 256, 256
      %16 = vsyncadd [#allocation4], %s15
      %s17 = sshll.u32 [#allocation3], 4
      %s18 = int_to_ptr.vmem [resolvable:$true] %s17
      %23 = dma.hbm_to_vmem [thread:$0]  %s1, 256, %s18, [#allocation4], 128, 128, 8
    $region9: #{tpu_custom_call.1} parent=1 // pred_fallthru
      _
    // Predicated region
    $region10: #{tpu_custom_call.1} parent=1 // pred_check
      _
    $region11: #{tpu_custom_call.1} parent=1 // pred_check_branch
      %25 = sbr.rel (0) target = $region13
    $region12: #{tpu_custom_call.1} parent=1 // pred_region
      %26 = dma.done [#allocation4], 256
    $region13: #{tpu_custom_call.1} parent=1 // pred_fallthru
      _
    %v27 = vld [vmem:[#allocation3] sm:$0xff]
    %v28 = vld [vmem:[#allocation3 + $0x8] sm:$0xff]
    %v29 = vmul.f32 %v27, %v27
    %v30 = vmul.f32 %v28, %v28
    %31 = vadd.xlane.f32.xlu0 %v29
    %v32 = vpop.xlane.xlu0 %31
    %33 = vadd.xlane.f32.xlu0 %v30
    %v34 = vpop.xlane.xlu0 %33
    %v35 = vmul.f32 %v32, 0.0078125
    %v36 = vmul.f32 %v34, 0.0078125
    %v37 = vadd.f32 %v35, 1e-05
    %v38 = vadd.f32 %v36, 1e-05
    %v39 = vrsqrt.pop %v37
    %v40 = vrsqrt.pop %v38
    %s41 = sld [smem:[#allocation2]]
    %v42 = vstv %s41
    %v43 = vmul.f32 %v39, %v42
    %v44 = vmul.f32 %v40, %v42
    %v45 = vmul.f32 %v27, %v43
    %v46 = vmul.f32 %v28, %v44
    %47 = vst [vmem:[#allocation6] sm:$0xff] %v45
    %48 = vst [vmem:[#allocation6 + $0x8] sm:$0xff] %v46
    // Predicated region
    $region14: #{tpu_custom_call.1} parent=1 // pred_check
      _
    $region15: #{tpu_custom_call.1} parent=1 // pred_check_branch
      %50 = sbr.rel (0) target = $region17
    $region16: #{tpu_custom_call.1} parent=1 // pred_region
      %s52 = ssub.s32 256, 256
      %53 = vsyncadd [#allocation5], %s52
      %s54 = sshll.u32 [#allocation6], 4
      %s55 = int_to_ptr.vmem [resolvable:$true] %s54
      %60 = dma.vmem_to_hbm [thread:$0]  %s55, 256, %s2, [#allocation5], 128, 128, 8
    $region17: #{tpu_custom_call.1} parent=1 // pred_fallthru
      _
    // Predicated region
    $region18: #{tpu_custom_call.1} parent=1 // pred_check
      _
    $region19: #{tpu_custom_call.1} parent=1 // pred_check_branch
      %62 = sbr.rel (0) target = $region21
    $region20: #{tpu_custom_call.1} parent=1 // pred_region
      %63 = dma.done [#allocation5], 256
    $region21: #{tpu_custom_call.1} parent=1 // pred_fallthru
      _
    %64 = vsyncpa [#allocation4], 1
    %65 = vsyncpa [#allocation5], 1

</llo_original>
